<compile_context>
chip_gen: v6e
topology: v6e:2x2x1
jax: 0.10.0
libtpu: 0.0.40
codegen_flags: <defaults>
</compile_context>

<pallas_src>
import functools

import jax
import jax.numpy as jnp
from jax.experimental import pallas as pl
from jax.experimental.pallas import tpu as pltpu


def _round_up(x, m):
    return (x + m - 1) // m * m


def _rnn_kernel(xproj_ref, whh_ref, h_ref, *, chunk, n_chains, rows):
    """One grid step == `chunk` consecutive timesteps of the Elman RNN.

    xproj_ref : (chunk, Bt, Hp)  precomputed x_t @ W_ih^T + (b_ih + b_hh)
    whh_ref   : (Hp, Hp)         W_hh^T (zero padded, grid-invariant, 1-buffered)
    h_ref     : (Bt, Hp)         resident output block == hidden-state carry
    """
    c = pl.program_id(1)                       # time-chunk axis (sequential)

    @pl.when(c == 0)
    def _init():
        h_ref[...] = jnp.zeros_like(h_ref)

    whh = whh_ref[...]

    # n_chains independent batch sub-blocks: their matmul -> add -> tanh chains
    # are interleaved per timestep so the MXU work of one overlaps the EUP tanh
    # and VPU add of the other (different VLIW slots), hiding per-step latency.
    hs = [h_ref[pl.ds(k * rows, rows), :] for k in range(n_chains)]

    # TODO(synk): drive the MXU weight-stationary (pltpu.matmul_push_rhs once per
    # chunk + matmul_acc_lhs / matmul_pop per timestep) so the Hp x Hp weight is
    # not re-pushed for every small-batch vmatmul; jnp.dot kept for robustness.
    for t in range(chunk):                     # bounded unroll (chunk <= 8..32)
        xp = xproj_ref[t]                      # (Bt, Hp), static leading index
        ss = [jnp.dot(hs[k].astype(whh.dtype), whh,
                      preferred_element_type=jnp.float32)
              for k in range(n_chains)]
        hs = [jnp.tanh(xp[k * rows:(k + 1) * rows, :].astype(jnp.float32) + ss[k])
              for k in range(n_chains)]

    for k in range(n_chains):
        h_ref[pl.ds(k * rows, rows), :] = hs[k]


@jax.jit
def rnn_forward(x, w_ih, w_hh, b_ih, b_hh, w2, b2):
    """x: (B, T, 1) float32.  Returns y: (B, 1) float32."""
    x = x.astype(jnp.float32)
    B, T, _ = x.shape
    H = w_hh.shape[0]

    # vreg / MXU friendly padding: lanes = 128, f32 sublanes = 8.
    Hp = _round_up(max(H, 128), 128)
    Bp = _round_up(max(B, 8), 8)

    # v7x megacore: shard independent batch rows across the 2 TensorCores with a
    # leading "parallel" grid axis once the batch is big enough.
    if Bp >= 32:
        Bp = _round_up(Bp, 32)
        num_b_blocks = 2
    else:
        num_b_blocks = 1
    Bt = Bp // num_b_blocks
    n_chains = 2 if (Bt >= 16 and Bt % 16 == 0) else 1
    rows = Bt // n_chains

    # bf16 weights / xproj stream for big hidden sizes (v6e/v7x MXU ~2x, half the
    # DMA); keep f32 for small Hp so numerics match the f32 reference tightly
    # (and for v5e's f32-only VPU/EUP elementwise path, which upcasts anyway).
    stream_dtype = jnp.bfloat16 if Hp >= 256 else jnp.float32
    stream_bytes = jnp.dtype(stream_dtype).itemsize

    # ---- VMEM-aware time-chunk selection ----------------------------------
    # Amortizes the ~600-cycle grid-step overhead, bounds the unroll / register
    # pressure, and respects v7x's 64 MiB physical / v5e's small scoped VMEM.
    max_chunk = 8 if Hp >= 512 else (16 if Hp >= 256 else 32)
    chunk = min(max_chunk, T)

    def _footprint(ch):
        return (2 * ch * Bt * Hp * stream_bytes      # double-buffered xproj stream
                + Hp * Hp * stream_bytes             # whh, single-buffered
                + 2 * Bt * Hp * 4)                   # resident f32 output

    budget = 20 * 1024 * 1024
    while chunk > 1 and _footprint(chunk) > budget:
        chunk //= 2

    # Front-pad T with zero timesteps so chunk need not divide T: with h0 = 0 and
    # zero xproj the hidden state stays exactly 0 through the pad steps (exact).
    T_pad = _round_up(T, chunk)
    num_chunks = T_pad // chunk

    # ---- hoisted input projection (outside the serial chain), lane-dense ---
    bias = (b_ih + b_hh).astype(jnp.float32)                            # (H,)
    x_proj = jnp.einsum('bti,hi->tbh', x, w_ih.astype(jnp.float32)) + bias
    x_proj = jnp.pad(x_proj, ((T_pad - T, 0), (0, Bp - B), (0, Hp - H)))
    x_proj = x_proj.astype(stream_dtype)                                # (T_pad, Bp, Hp)

    # Zero-padded recurrent weight: padded rows/cols keep padded h entries 0.
    whh_p = jnp.pad(w_hh.T.astype(jnp.float32),
                    ((0, Hp - H), (0, Hp - H))).astype(stream_dtype)    # (Hp, Hp)

    kernel = functools.partial(_rnn_kernel, chunk=chunk,
                               n_chains=n_chains, rows=rows)

    cost = pl.CostEstimate(
        flops=2 * T_pad * Bp * Hp * Hp,
        transcendentals=T_pad * Bp * Hp,
        bytes_accessed=(T_pad * Bp * Hp * stream_bytes
                        + Hp * Hp * stream_bytes + Bp * Hp * 4),
    )

    grid_spec = pltpu.PrefetchScalarGridSpec(
        num_scalar_prefetch=0,
        grid=(num_b_blocks, num_chunks),
        in_specs=[
            # lane-dense chunk of precomputed input projections
            pl.BlockSpec((chunk, Bt, Hp), lambda b, c: (c, b, 0)),
            # grid-invariant recurrent weight: single-buffered (no wasted 2x VMEM)
            pl.BlockSpec((Hp, Hp), lambda b, c: (0, 0),
                         pipeline_mode=pl.Buffered(1)),
        ],
        # Constant index across the chunk axis => resident accumulator; it also
        # serves as the hidden-state carry (no extra VMEM scratch, no finalize).
        out_specs=pl.BlockSpec((Bt, Hp), lambda b, c: (b, 0)),
    )

    vmem_limit = int(min(max(32 * 1024 * 1024,
                             _footprint(chunk) + 8 * 1024 * 1024),
                         100 * 1024 * 1024))

    h_last = pl.pallas_call(
        kernel,
        out_shape=jax.ShapeDtypeStruct((Bp, Hp), jnp.float32),
        grid_spec=grid_spec,
        compiler_params=pltpu.CompilerParams(
            dimension_semantics=("parallel", "arbitrary"),
            vmem_limit_bytes=vmem_limit),
        cost_estimate=cost,
    )(x_proj, whh_p)

    # Tiny Linear(H, 1) head on the lane-dense last hidden state, done in XLA
    # (avoids lane-width-1 stores / per-step XLU reductions inside the kernel).
    return h_last[:B, :H] @ w2.T.astype(jnp.float32) + b2.astype(jnp.float32)


def _reference_forward(x, w_ih, w_hh, b_ih, b_hh, w2, b2):
    """Pure-JAX reference matching torch.nn.RNN(batch_first=True) + Linear."""
    B, T, _ = x.shape
    H = w_hh.shape[0]

    def step(h, x_t):
        h_new = jnp.tanh(x_t @ w_ih.T + h @ w_hh.T + b_ih + b_hh)
        return h_new, None

    h0 = jnp.zeros((B, H), jnp.float32)
    h_last, _ = jax.lax.scan(step, h0, jnp.transpose(x, (1, 0, 2)))
    return h_last @ w2.T + b2


if __name__ == "__main__":
    B, T, H = 2, 8, 32
    key = jax.random.PRNGKey(0)
    k_x, k_ih, k_hh, k_bih, k_bhh, k_w2, k_b2 = jax.random.split(key, 7)

    # Parameter init mirroring the module's __init__: xavier_normal_ for W_ih,
    # orthogonal_ for W_hh, default-uniform biases / Linear head.
    xavier_std = (2.0 / (1 + H)) ** 0.5
    w_ih = xavier_std * jax.random.normal(k_ih, (H, 1), jnp.float32)       # (H, 1)
    w_hh, _ = jnp.linalg.qr(jax.random.normal(k_hh, (H, H), jnp.float32))  # (H, H)
    bound = 1.0 / (H ** 0.5)
    b_ih = jax.random.uniform(k_bih, (H,), jnp.float32, -bound, bound)
    b_hh = jax.random.uniform(k_bhh, (H,), jnp.float32, -bound, bound)
    w2 = jax.random.uniform(k_w2, (1, H), jnp.float32, -bound, bound)
    b2 = jax.random.uniform(k_b2, (1,), jnp.float32, -bound, bound)

    x = jax.random.normal(k_x, (B, T, 1), jnp.float32)

    y = jax.block_until_ready(rnn_forward(x, w_ih, w_hh, b_ih, b_hh, w2, b2))
    y_ref = _reference_forward(x, w_ih, w_hh, b_ih, b_hh, w2, b2)

    assert y.shape == (B, 1)
    assert jnp.allclose(y, y_ref, rtol=1e-5, atol=1e-5), (y, y_ref)

    print("KERNEL_OK")
</pallas_src>

<mosaic_0001>
module attributes {stable_mosaic.version = 11 : i64} {
  func.func @_rnn_kernel(%arg0: i32, %arg1: i32, %arg2: memref<8x8x128xf32, #tpu.memory_space<vmem>>, %arg3: memref<128x128xf32, #tpu.memory_space<vmem>>, %arg4: memref<8x128xf32, #tpu.memory_space<vmem>>) attributes {dimension_semantics = [#tpu.dimension_semantics<parallel>, #tpu.dimension_semantics<arbitrary>], iteration_bounds = array<i64: 1, 1>, scalar_prefetch = 0 : i64, scratch_operands = 0 : i64, tpu.core_type = #tpu.core_type<tc>, window_params = [{transform_indices = @transform_0, window_bounds = array<i64: 8, 8, 128>}, {pipeline_mode = #tpu.pipeline_mode<synchronous>, transform_indices = @transform_1, window_bounds = array<i64: 128, 128>}, {transform_indices = @transform_2, window_bounds = array<i64: 8, 128>}]} {
    %c0_i32 = arith.constant 0 : i32
    %0 = arith.cmpi eq, %arg1, %c0_i32 : i32
    %1 = arith.extui %0 : i1 to i32
    %c0_i32_0 = arith.constant 0 : i32
    %2 = arith.cmpi ne, %1, %c0_i32_0 : i32
    scf.if %2 {
      %cst_30 = arith.constant 0.000000e+00 : f32
      %46 = vector.broadcast %cst_30 : f32 to vector<8x128xf32>
      %c0_31 = arith.constant 0 : index
      %c0_32 = arith.constant 0 : index
      %47 = vector.load %arg4[%c0_31, %c0_32] : memref<8x128xf32, #tpu.memory_space<vmem>>, vector<8x128xf32>
      tpu.vector_store %arg4[%c0_31, %c0_32], %46 {strides = array<i32>} : memref<8x128xf32, #tpu.memory_space<vmem>>, vector<8x128xf32>,
    } else {
    }
    %c0 = arith.constant 0 : index
    %c0_1 = arith.constant 0 : index
    %3 = vector.load %arg3[%c0, %c0_1] : memref<128x128xf32, #tpu.memory_space<vmem>>, vector<128x128xf32>
    %c0_2 = arith.constant 0 : index
    %c0_3 = arith.constant 0 : index
    %4 = vector.load %arg4[%c0_2, %c0_3] : memref<8x128xf32, #tpu.memory_space<vmem>>, vector<8x128xf32>
    %c0_4 = arith.constant 0 : index
    %c0_5 = arith.constant 0 : index
    %c0_6 = arith.constant 0 : index
    %5 = vector.load %arg2[%c0_4, %c0_5, %c0_6] : memref<8x8x128xf32, #tpu.memory_space<vmem>>, vector<1x8x128xf32>
    %6 = vector.shape_cast %5 : vector<1x8x128xf32> to vector<8x128xf32>
    %cst = arith.constant dense<0.000000e+00> : vector<8x128xf32>
    %7 = tpu.matmul %4, %3, %cst {dimension_numbers = #tpu.dot_dimension_numbers<[1], [0], [0], [1], [0, 0, 1, 1], [], []>} : vector<8x128xf32>, vector<128x128xf32>, vector<8x128xf32> -> vector<8x128xf32>
    %8 = arith.addf %6, %7 : vector<8x128xf32>
    %9 = math.tanh %8 : vector<8x128xf32>
    %c1 = arith.constant 1 : index
    %c0_7 = arith.constant 0 : index
    %c0_8 = arith.constant 0 : index
    %10 = vector.load %arg2[%c1, %c0_7, %c0_8] : memref<8x8x128xf32, #tpu.memory_space<vmem>>, vector<1x8x128xf32>
    %11 = vector.shape_cast %10 : vector<1x8x128xf32> to vector<8x128xf32>
    %cst_9 = arith.constant dense<0.000000e+00> : vector<8x128xf32>
    %12 = tpu.matmul %9, %3, %cst_9 {dimension_numbers = #tpu.dot_dimension_numbers<[1], [0], [0], [1], [0, 0, 1, 1], [], []>} : vector<8x128xf32>, vector<128x128xf32>, vector<8x128xf32> -> vector<8x128xf32>
    %13 = arith.addf %11, %12 : vector<8x128xf32>
    %14 = math.tanh %13 : vector<8x128xf32>
    %c2 = arith.constant 2 : index
    %c0_10 = arith.constant 0 : index
    %c0_11 = arith.constant 0 : index
    %15 = vector.load %arg2[%c2, %c0_10, %c0_11] : memref<8x8x128xf32, #tpu.memory_space<vmem>>, vector<1x8x128xf32>
    %16 = vector.shape_cast %15 : vector<1x8x128xf32> to vector<8x128xf32>
    %cst_12 = arith.constant dense<0.000000e+00> : vector<8x128xf32>
    %17 = tpu.matmul %14, %3, %cst_12 {dimension_numbers = #tpu.dot_dimension_numbers<[1], [0], [0], [1], [0, 0, 1, 1], [], []>} : vector<8x128xf32>, vector<128x128xf32>, vector<8x128xf32> -> vector<8x128xf32>
    %18 = arith.addf %16, %17 : vector<8x128xf32>
    %19 = math.tanh %18 : vector<8x128xf32>
    %c3 = arith.constant 3 : index
    %c0_13 = arith.constant 0 : index
    %c0_14 = arith.constant 0 : index
    %20 = vector.load %arg2[%c3, %c0_13, %c0_14] : memref<8x8x128xf32, #tpu.memory_space<vmem>>, vector<1x8x128xf32>
    %21 = vector.shape_cast %20 : vector<1x8x128xf32> to vector<8x128xf32>
    %cst_15 = arith.constant dense<0.000000e+00> : vector<8x128xf32>
    %22 = tpu.matmul %19, %3, %cst_15 {dimension_numbers = #tpu.dot_dimension_numbers<[1], [0], [0], [1], [0, 0, 1, 1], [], []>} : vector<8x128xf32>, vector<128x128xf32>, vector<8x128xf32> -> vector<8x128xf32>
    %23 = arith.addf %21, %22 : vector<8x128xf32>
    %24 = math.tanh %23 : vector<8x128xf32>
    %c4 = arith.constant 4 : index
    %c0_16 = arith.constant 0 : index
    %c0_17 = arith.constant 0 : index
    %25 = vector.load %arg2[%c4, %c0_16, %c0_17] : memref<8x8x128xf32, #tpu.memory_space<vmem>>, vector<1x8x128xf32>
    %26 = vector.shape_cast %25 : vector<1x8x128xf32> to vector<8x128xf32>
    %cst_18 = arith.constant dense<0.000000e+00> : vector<8x128xf32>
    %27 = tpu.matmul %24, %3, %cst_18 {dimension_numbers = #tpu.dot_dimension_numbers<[1], [0], [0], [1], [0, 0, 1, 1], [], []>} : vector<8x128xf32>, vector<128x128xf32>, vector<8x128xf32> -> vector<8x128xf32>
    %28 = arith.addf %26, %27 : vector<8x128xf32>
    %29 = math.tanh %28 : vector<8x128xf32>
    %c5 = arith.constant 5 : index
    %c0_19 = arith.constant 0 : index
    %c0_20 = arith.constant 0 : index
    %30 = vector.load %arg2[%c5, %c0_19, %c0_20] : memref<8x8x128xf32, #tpu.memory_space<vmem>>, vector<1x8x128xf32>
    %31 = vector.shape_cast %30 : vector<1x8x128xf32> to vector<8x128xf32>
    %cst_21 = arith.constant dense<0.000000e+00> : vector<8x128xf32>
    %32 = tpu.matmul %29, %3, %cst_21 {dimension_numbers = #tpu.dot_dimension_numbers<[1], [0], [0], [1], [0, 0, 1, 1], [], []>} : vector<8x128xf32>, vector<128x128xf32>, vector<8x128xf32> -> vector<8x128xf32>
    %33 = arith.addf %31, %32 : vector<8x128xf32>
    %34 = math.tanh %33 : vector<8x128xf32>
    %c6 = arith.constant 6 : index
    %c0_22 = arith.constant 0 : index
    %c0_23 = arith.constant 0 : index
    %35 = vector.load %arg2[%c6, %c0_22, %c0_23] : memref<8x8x128xf32, #tpu.memory_space<vmem>>, vector<1x8x128xf32>
    %36 = vector.shape_cast %35 : vector<1x8x128xf32> to vector<8x128xf32>
    %cst_24 = arith.constant dense<0.000000e+00> : vector<8x128xf32>
    %37 = tpu.matmul %34, %3, %cst_24 {dimension_numbers = #tpu.dot_dimension_numbers<[1], [0], [0], [1], [0, 0, 1, 1], [], []>} : vector<8x128xf32>, vector<128x128xf32>, vector<8x128xf32> -> vector<8x128xf32>
    %38 = arith.addf %36, %37 : vector<8x128xf32>
    %39 = math.tanh %38 : vector<8x128xf32>
    %c7 = arith.constant 7 : index
    %c0_25 = arith.constant 0 : index
    %c0_26 = arith.constant 0 : index
    %40 = vector.load %arg2[%c7, %c0_25, %c0_26] : memref<8x8x128xf32, #tpu.memory_space<vmem>>, vector<1x8x128xf32>
    %41 = vector.shape_cast %40 : vector<1x8x128xf32> to vector<8x128xf32>
    %cst_27 = arith.constant dense<0.000000e+00> : vector<8x128xf32>
    %42 = tpu.matmul %39, %3, %cst_27 {dimension_numbers = #tpu.dot_dimension_numbers<[1], [0], [0], [1], [0, 0, 1, 1], [], []>} : vector<8x128xf32>, vector<128x128xf32>, vector<8x128xf32> -> vector<8x128xf32>
    %43 = arith.addf %41, %42 : vector<8x128xf32>
    %44 = math.tanh %43 : vector<8x128xf32>
    %c0_28 = arith.constant 0 : index
    %c0_29 = arith.constant 0 : index
    %45 = vector.load %arg4[%c0_28, %c0_29] : memref<8x128xf32, #tpu.memory_space<vmem>>, vector<8x128xf32>
    tpu.vector_store %arg4[%c0_28, %c0_29], %44 {strides = array<i32>} : memref<8x128xf32, #tpu.memory_space<vmem>>, vector<8x128xf32>,
    return
  }
  func.func @transform_0(%arg0: i32, %arg1: i32) -> (i32, i32, i32) {
    %c0_i32 = arith.constant 0 : i32
    %c0_i32_0 = arith.constant 0 : i32
    return %arg1, %arg0, %c0_i32 : i32, i32, i32
  }
  func.func @transform_1(%arg0: i32, %arg1: i32) -> (i32, i32) {
    %c0_i32 = arith.constant 0 : i32
    %c0_i32_0 = arith.constant 0 : i32
    %c0_i32_1 = arith.constant 0 : i32
    return %c0_i32, %c0_i32_0 : i32, i32
  }
  func.func @transform_2(%arg0: i32, %arg1: i32) -> (i32, i32) {
    %c0_i32 = arith.constant 0 : i32
    %c0_i32_0 = arith.constant 0 : i32
    return %arg0, %c0_i32 : i32, i32
  }
}

</mosaic_0001>

<llo_original>
// kernel: rnn_forward.1
$region0: #{rnn_forward.1}
  #allocation0 [shape = 'u32[]', space=smem, size = 0x4, offset = 0x4, fixed_abs, tag = 'smem constant byte address 0x4 - core index']
  #allocation1 [shape = 'u32[144,128]{1,0:T(1,128)}', space=vmem, size = 0x12000, scoped, tag = 'internal scratch']
  %s0 = inlined_call_operand.vmem [shape: f32[8,8,128], index: 0, kind: input, shape index: {}]
  %s1 = inlined_call_operand.vmem [shape: f32[128,128], index: 1, kind: input, shape index: {}]
  %s2 = inlined_call_operand.vmem [shape: f32[8,128], index: 2, kind: output, shape index: {}]
  %s3 = sld [smem:[#allocation0]]
  $region22: #{rnn_forward.1} parent=0
    _
  %s5 = ssub.s32 1, %s3
  %s6 = scalar_select 0, %s5, %s3
  // Predicated region
  $region2: #{rnn_forward.1} parent=0 // pred_check
    _
  $region3: #{rnn_forward.1} parent=0 // pred_check_branch
    %8 = sbr.rel (0) target = $region5
  $region4: #{rnn_forward.1} parent=0 // pred_region
    _
  $region5: #{rnn_forward.1} parent=0 // pred_fallthru
    _
  // Predicated region
  $region6: #{rnn_forward.1} parent=0 // pred_check
    _
  $region7: #{rnn_forward.1} parent=0 // pred_check_branch
    %10 = sbr.rel (0) target = $region9
  $region8: #{rnn_forward.1} parent=0 // pred_region
    _
  $region9: #{rnn_forward.1} parent=0 // pred_fallthru
    _
  %p11 = scmp.eq.s32.totalorder 0, 0
  // Predicated region
  $region10: #{rnn_forward.1} parent=0 // pred_check
    %p12 = pneg %p11
  $region11: #{rnn_forward.1} parent=0 // pred_check_branch
    %14 = sbr.rel (%p12) target = $region13
  $region12: #{rnn_forward.1} parent=0 // pred_region
    %15 = vst [vmem:[%s2] sm:$0xff] 0.0
  $region13: #{rnn_forward.1} parent=0 // pred_fallthru
    _
  %v16 = vld [vmem:[%s1] sm:$0xff]
  %v17 = vld [vmem:[%s1 + $0x8] sm:$0xff]
  %v18 = vld [vmem:[%s1 + $0x10] sm:$0xff]
  %v19 = vld [vmem:[%s1 + $0x18] sm:$0xff]
  %v20 = vld [vmem:[%s1 + $0x20] sm:$0xff]
  %v21 = vld [vmem:[%s1 + $0x28] sm:$0xff]
  %v22 = vld [vmem:[%s1 + $0x30] sm:$0xff]
  %v23 = vld [vmem:[%s1 + $0x38] sm:$0xff]
  %v24 = vld [vmem:[%s1 + $0x40] sm:$0xff]
  %v25 = vld [vmem:[%s1 + $0x48] sm:$0xff]
  %v26 = vld [vmem:[%s1 + $0x50] sm:$0xff]
  %v27 = vld [vmem:[%s1 + $0x58] sm:$0xff]
  %v28 = vld [vmem:[%s1 + $0x60] sm:$0xff]
  %v29 = vld [vmem:[%s1 + $0x68] sm:$0xff]
  %v30 = vld [vmem:[%s1 + $0x70] sm:$0xff]
  %v31 = vld [vmem:[%s1 + $0x78] sm:$0xff]
  %v32 = vld [vmem:[%s2] sm:$0xff]
  %v33 = vld [vmem:[%s0] sm:$0xff]
  %34 = vmatprep.subr.mxu0 0.0
  %35 = vmatpush1.msra.mxu0 %v31
  %36 = vmatprep.subr.mxu0 0.0
  %37 = vmatpush1.msra.mxu0 %v30
  %38 = vmatprep.subr.mxu0 0.0
  %39 = vmatpush1.msra.mxu0 %v29
  %40 = vmatprep.subr.mxu0 0.0
  %41 = vmatpush1.msra.mxu0 %v28
  %42 = vmatprep.subr.mxu0 0.0
  %43 = vmatpush1.msra.mxu0 %v27
  %44 = vmatprep.subr.mxu0 0.0
  %45 = vmatpush1.msra.mxu0 %v26
  %46 = vmatprep.subr.mxu0 0.0
  %47 = vmatpush1.msra.mxu0 %v25
  %48 = vmatprep.subr.mxu0 0.0
  %49 = vmatpush1.msra.mxu0 %v24
  %50 = vmatprep.subr.mxu0 0.0
  %51 = vmatpush1.msra.mxu0 %v23
  %52 = vmatprep.subr.mxu0 0.0
  %53 = vmatpush1.msra.mxu0 %v22
  %54 = vmatprep.subr.mxu0 0.0
  %55 = vmatpush1.msra.mxu0 %v21
  %56 = vmatprep.subr.mxu0 0.0
  %57 = vmatpush1.msra.mxu0 %v20
  %58 = vmatprep.subr.mxu0 0.0
  %59 = vmatpush1.msra.mxu0 %v19
  %60 = vmatprep.subr.mxu0 0.0
  %61 = vmatpush1.msra.mxu0 %v18
  %62 = vmatprep.subr.mxu0 0.0
  %63 = vmatpush1.msra.mxu0 %v17
  %64 = vmatprep.subr.mxu0 0.0
  %65 = vmatpush1.msra.mxu0 %v16
  %66 = vmatprep.subr.mxu0 0.0
  %67 = vmatpush2.msra.mxu0 0.0
  %68 = vmatprep.subr.mxu0 0.0
  %69 = vmatpush2.msra.mxu0 0.0
  %70 = vmatprep.subr.mxu0 0.0
  %71 = vmatpush2.msra.mxu0 0.0
  %72 = vmatprep.subr.mxu0 0.0
  %73 = vmatpush2.msra.mxu0 0.0
  %74 = vmatprep.subr.mxu0 0.0
  %75 = vmatpush2.msra.mxu0 0.0
  %76 = vmatprep.subr.mxu0 0.0
  %77 = vmatpush2.msra.mxu0 0.0
  %78 = vmatprep.subr.mxu0 0.0
  %79 = vmatpush2.msra.mxu0 0.0
  %80 = vmatprep.subr.mxu0 0.0
  %81 = vmatpush2.msra.mxu0 0.0
  %82 = vmatprep.subr.mxu0 0.0
  %83 = vmatpush2.msra.mxu0 0.0
  %84 = vmatprep.subr.mxu0 0.0
  %85 = vmatpush2.msra.mxu0 0.0
  %86 = vmatprep.subr.mxu0 0.0
  %87 = vmatpush2.msra.mxu0 0.0
  %88 = vmatprep.subr.mxu0 0.0
  %89 = vmatpush2.msra.mxu0 0.0
  %90 = vmatprep.subr.mxu0 0.0
  %91 = vmatpush2.msra.mxu0 0.0
  %92 = vmatprep.subr.mxu0 0.0
  %93 = vmatpush2.msra.mxu0 0.0
  %94 = vmatprep.subr.mxu0 0.0
  %95 = vmatpush2.msra.mxu0 0.0
  %96 = vmatprep.subr.mxu0 0.0
  %97 = vmatpush2.msra.mxu0 0.0
  %98 = vmatprep.mubr.f32.mxu0 0.0
  %99 = vmatmul.mubr.f32.gmra.mxu0 %v32
  %v100 = vpop.f32.mrf.mxu0
  %v101 = vadd.f32 0.0, %v100
  %v102 = vpop.f32.mrf.mxu0
  %103 = vdwg.mxu0
  %v104 = vadd.f32 %v33, %v101
  %v105 = vtanh.pop %v104
  %s106 = scalar_lea.vmem %s0, 8
  %v107 = vld [vmem:[%s106] sm:$0xff]
  %108 = vmatprep.subr.mxu0 0.0
  %109 = vmatpush1.msra.mxu0 %v31
  %110 = vmatprep.subr.mxu0 0.0
  %111 = vmatpush1.msra.mxu0 %v30
  %112 = vmatprep.subr.mxu0 0.0
  %113 = vmatpush1.msra.mxu0 %v29
  %114 = vmatprep.subr.mxu0 0.0
  %115 = vmatpush1.msra.mxu0 %v28
  %116 = vmatprep.subr.mxu0 0.0
  %117 = vmatpush1.msra.mxu0 %v27
  %118 = vmatprep.subr.mxu0 0.0
  %119 = vmatpush1.msra.mxu0 %v26
  %120 = vmatprep.subr.mxu0 0.0
  %121 = vmatpush1.msra.mxu0 %v25
  %122 = vmatprep.subr.mxu0 0.0
  %123 = vmatpush1.msra.mxu0 %v24
  %124 = vmatprep.subr.mxu0 0.0
  %125 = vmatpush1.msra.mxu0 %v23
  %126 = vmatprep.subr.mxu0 0.0
  %127 = vmatpush1.msra.mxu0 %v22
  %128 = vmatprep.subr.mxu0 0.0
  %129 = vmatpush1.msra.mxu0 %v21
  %130 = vmatprep.subr.mxu0 0.0
  %131 = vmatpush1.msra.mxu0 %v20
  %132 = vmatprep.subr.mxu0 0.0
  %133 = vmatpush1.msra.mxu0 %v19
  %134 = vmatprep.subr.mxu0 0.0
  %135 = vmatpush1.msra.mxu0 %v18
  %136 = vmatprep.subr.mxu0 0.0
  %137 = vmatpush1.msra.mxu0 %v17
  %138 = vmatprep.subr.mxu0 0.0
  %139 = vmatpush1.msra.mxu0 %v16
  %140 = vmatprep.subr.mxu0 0.0
  %141 = vmatpush2.msra.mxu0 0.0
  %142 = vmatprep.subr.mxu0 0.0
  %143 = vmatpush2.msra.mxu0 0.0
  %144 = vmatprep.subr.mxu0 0.0
  %145 = vmatpush2.msra.mxu0 0.0
  %146 = vmatprep.subr.mxu0 0.0
  %147 = vmatpush2.msra.mxu0 0.0
  %148 = vmatprep.subr.mxu0 0.0
  %149 = vmatpush2.msra.mxu0 0.0
  %150 = vmatprep.subr.mxu0 0.0
  %151 = vmatpush2.msra.mxu0 0.0
  %152 = vmatprep.subr.mxu0 0.0
  %153 = vmatpush2.msra.mxu0 0.0
  %154 = vmatprep.subr.mxu0 0.0
  %155 = vmatpush2.msra.mxu0 0.0
  %156 = vmatprep.subr.mxu0 0.0
  %157 = vmatpush2.msra.mxu0 0.0
  %158 = vmatprep.subr.mxu0 0.0
  %159 = vmatpush2.msra.mxu0 0.0
  %160 = vmatprep.subr.mxu0 0.0
  %161 = vmatpush2.msra.mxu0 0.0
  %162 = vmatprep.subr.mxu0 0.0
  %163 = vmatpush2.msra.mxu0 0.0
  %164 = vmatprep.subr.mxu0 0.0
  %165 = vmatpush2.msra.mxu0 0.0
  %166 = vmatprep.subr.mxu0 0.0
  %167 = vmatpush2.msra.mxu0 0.0
  %168 = vmatprep.subr.mxu0 0.0
  %169 = vmatpush2.msra.mxu0 0.0
  %170 = vmatprep.subr.mxu0 0.0
  %171 = vmatpush2.msra.mxu0 0.0
  %172 = vmatprep.mubr.f32.mxu0 0.0
  %173 = vmatmul.mubr.f32.gmra.mxu0 %v105
  %v174 = vpop.f32.mrf.mxu0
  %v175 = vadd.f32 0.0, %v174
  %v176 = vpop.f32.mrf.mxu0
  %177 = vdwg.mxu0
  %v178 = vadd.f32 %v107, %v175
  %v179 = vtanh.pop %v178
  %s180 = scalar_lea.vmem %s0, 16
  %v181 = vld [vmem:[%s180] sm:$0xff]
  %182 = vmatprep.subr.mxu0 0.0
  %183 = vmatpush1.msra.mxu0 %v31
  %184 = vmatprep.subr.mxu0 0.0
  %185 = vmatpush1.msra.mxu0 %v30
  %186 = vmatprep.subr.mxu0 0.0
  %187 = vmatpush1.msra.mxu0 %v29
  %188 = vmatprep.subr.mxu0 0.0
  %189 = vmatpush1.msra.mxu0 %v28
  %190 = vmatprep.subr.mxu0 0.0
  %191 = vmatpush1.msra.mxu0 %v27
  %192 = vmatprep.subr.mxu0 0.0
  %193 = vmatpush1.msra.mxu0 %v26
  %194 = vmatprep.subr.mxu0 0.0
  %195 = vmatpush1.msra.mxu0 %v25
  %196 = vmatprep.subr.mxu0 0.0
  %197 = vmatpush1.msra.mxu0 %v24
  %198 = vmatprep.subr.mxu0 0.0
  %199 = vmatpush1.msra.mxu0 %v23
  %200 = vmatprep.subr.mxu0 0.0
  %201 = vmatpush1.msra.mxu0 %v22
  %202 = vmatprep.subr.mxu0 0.0
  %203 = vmatpush1.msra.mxu0 %v21
  %204 = vmatprep.subr.mxu0 0.0
  %205 = vmatpush1.msra.mxu0 %v20
  %206 = vmatprep.subr.mxu0 0.0
  %207 = vmatpush1.msra.mxu0 %v19
  %208 = vmatprep.subr.mxu0 0.0
  %209 = vmatpush1.msra.mxu0 %v18
  %210 = vmatprep.subr.mxu0 0.0
  %211 = vmatpush1.msra.mxu0 %v17
  %212 = vmatprep.subr.mxu0 0.0
  %213 = vmatpush1.msra.mxu0 %v16
  %214 = vmatprep.subr.mxu0 0.0
  %215 = vmatpush2.msra.mxu0 0.0
  %216 = vmatprep.subr.mxu0 0.0
  %217 = vmatpush2.msra.mxu0 0.0
  %218 = vmatprep.subr.mxu0 0.0
  %219 = vmatpush2.msra.mxu0 0.0
  %220 = vmatprep.subr.mxu0 0.0
  %221 = vmatpush2.msra.mxu0 0.0
  %222 = vmatprep.subr.mxu0 0.0
  %223 = vmatpush2.msra.mxu0 0.0
  %224 = vmatprep.subr.mxu0 0.0
  %225 = vmatpush2.msra.mxu0 0.0
  %226 = vmatprep.subr.mxu0 0.0
  %227 = vmatpush2.msra.mxu0 0.0
  %228 = vmatprep.subr.mxu0 0.0
  %229 = vmatpush2.msra.mxu0 0.0
  %230 = vmatprep.subr.mxu0 0.0
  %231 = vmatpush2.msra.mxu0 0.0
  %232 = vmatprep.subr.mxu0 0.0
  %233 = vmatpush2.msra.mxu0 0.0
  %234 = vmatprep.subr.mxu0 0.0
  %235 = vmatpush2.msra.mxu0 0.0
  %236 = vmatprep.subr.mxu0 0.0
  %237 = vmatpush2.msra.mxu0 0.0
  %238 = vmatprep.subr.mxu0 0.0
  %239 = vmatpush2.msra.mxu0 0.0
  %240 = vmatprep.subr.mxu0 0.0
  %241 = vmatpush2.msra.mxu0 0.0
  %242 = vmatprep.subr.mxu0 0.0
  %243 = vmatpush2.msra.mxu0 0.0
  %244 = vmatprep.subr.mxu0 0.0
  %245 = vmatpush2.msra.mxu0 0.0
  %246 = vmatprep.mubr.f32.mxu0 0.0
  %247 = vmatmul.mubr.f32.gmra.mxu0 %v179
  %v248 = vpop.f32.mrf.mxu0
  %v249 = vadd.f32 0.0, %v248
  %v250 = vpop.f32.mrf.mxu0
  %251 = vdwg.mxu0
  %v252 = vadd.f32 %v181, %v249
  %v253 = vtanh.pop %v252
  %s254 = scalar_lea.vmem %s0, 24
  %v255 = vld [vmem:[%s254] sm:$0xff]
  %256 = vmatprep.subr.mxu0 0.0
  %257 = vmatpush1.msra.mxu0 %v31
  %258 = vmatprep.subr.mxu0 0.0
  %259 = vmatpush1.msra.mxu0 %v30
  %260 = vmatprep.subr.mxu0 0.0
  %261 = vmatpush1.msra.mxu0 %v29
  %262 = vmatprep.subr.mxu0 0.0
  %263 = vmatpush1.msra.mxu0 %v28
  %264 = vmatprep.subr.mxu0 0.0
  %265 = vmatpush1.msra.mxu0 %v27
  %266 = vmatprep.subr.mxu0 0.0
  %267 = vmatpush1.msra.mxu0 %v26
  %268 = vmatprep.subr.mxu0 0.0
  %269 = vmatpush1.msra.mxu0 %v25
  %270 = vmatprep.subr.mxu0 0.0
  %271 = vmatpush1.msra.mxu0 %v24
  %272 = vmatprep.subr.mxu0 0.0
  %273 = vmatpush1.msra.mxu0 %v23
  %274 = vmatprep.subr.mxu0 0.0
  %275 = vmatpush1.msra.mxu0 %v22
  %276 = vmatprep.subr.mxu0 0.0
  %277 = vmatpush1.msra.mxu0 %v21
  %278 = vmatprep.subr.mxu0 0.0
  %279 = vmatpush1.msra.mxu0 %v20
  %280 = vmatprep.subr.mxu0 0.0
  %281 = vmatpush1.msra.mxu0 %v19
  %282 = vmatprep.subr.mxu0 0.0
  %283 = vmatpush1.msra.mxu0 %v18
  %284 = vmatprep.subr.mxu0 0.0
  %285 = vmatpush1.msra.mxu0 %v17
  %286 = vmatprep.subr.mxu0 0.0
  %287 = vmatpush1.msra.mxu0 %v16
  %288 = vmatprep.subr.mxu0 0.0
  %289 = vmatpush2.msra.mxu0 0.0
  %290 = vmatprep.subr.mxu0 0.0
  %291 = vmatpush2.msra.mxu0 0.0
  %292 = vmatprep.subr.mxu0 0.0
  %293 = vmatpush2.msra.mxu0 0.0
  %294 = vmatprep.subr.mxu0 0.0
  %295 = vmatpush2.msra.mxu0 0.0
  %296 = vmatprep.subr.mxu0 0.0
  %297 = vmatpush2.msra.mxu0 0.0
  %298 = vmatprep.subr.mxu0 0.0
  %299 = vmatpush2.msra.mxu0 0.0
  %300 = vmatprep.subr.mxu0 0.0
  %301 = vmatpush2.msra.mxu0 0.0
  %302 = vmatprep.subr.mxu0 0.0
  %303 = vmatpush2.msra.mxu0 0.0
  %304 = vmatprep.subr.mxu0 0.0
  %305 = vmatpush2.msra.mxu0 0.0
  %306 = vmatprep.subr.mxu0 0.0
  %307 = vmatpush2.msra.mxu0 0.0
  %308 = vmatprep.subr.mxu0 0.0
  %309 = vmatpush2.msra.mxu0 0.0
  %310 = vmatprep.subr.mxu0 0.0
  %311 = vmatpush2.msra.mxu0 0.0
  %312 = vmatprep.subr.mxu0 0.0
  %313 = vmatpush2.msra.mxu0 0.0
  %314 = vmatprep.subr.mxu0 0.0
  %315 = vmatpush2.msra.mxu0 0.0
  %316 = vmatprep.subr.mxu0 0.0
  %317 = vmatpush2.msra.mxu0 0.0
  %318 = vmatprep.subr.mxu0 0.0
  %319 = vmatpush2.msra.mxu0 0.0
  %320 = vmatprep.mubr.f32.mxu0 0.0
  %321 = vmatmul.mubr.f32.gmra.mxu0 %v253
  %v322 = vpop.f32.mrf.mxu0
  %v323 = vadd.f32 0.0, %v322
  %v324 = vpop.f32.mrf.mxu0
  %325 = vdwg.mxu0
  %v326 = vadd.f32 %v255, %v323
  %v327 = vtanh.pop %v326
  %s328 = scalar_lea.vmem %s0, 32
  %v329 = vld [vmem:[%s328] sm:$0xff]
  %330 = vmatprep.subr.mxu0 0.0
  %331 = vmatpush1.msra.mxu0 %v31
  %332 = vmatprep.subr.mxu0 0.0
  %333 = vmatpush1.msra.mxu0 %v30
  %334 = vmatprep.subr.mxu0 0.0
  %335 = vmatpush1.msra.mxu0 %v29
  %336 = vmatprep.subr.mxu0 0.0
  %337 = vmatpush1.msra.mxu0 %v28
  %338 = vmatprep.subr.mxu0 0.0
  %339 = vmatpush1.msra.mxu0 %v27
  %340 = vmatprep.subr.mxu0 0.0
  %341 = vmatpush1.msra.mxu0 %v26
  %342 = vmatprep.subr.mxu0 0.0
  %343 = vmatpush1.msra.mxu0 %v25
  %344 = vmatprep.subr.mxu0 0.0
  %345 = vmatpush1.msra.mxu0 %v24
  %346 = vmatprep.subr.mxu0 0.0
  %347 = vmatpush1.msra.mxu0 %v23
  %348 = vmatprep.subr.mxu0 0.0
  %349 = vmatpush1.msra.mxu0 %v22
  %350 = vmatprep.subr.mxu0 0.0
  %351 = vmatpush1.msra.mxu0 %v21
  %352 = vmatprep.subr.mxu0 0.0
  %353 = vmatpush1.msra.mxu0 %v20
  %354 = vmatprep.subr.mxu0 0.0
  %355 = vmatpush1.msra.mxu0 %v19
  %356 = vmatprep.subr.mxu0 0.0
  %357 = vmatpush1.msra.mxu0 %v18
  %358 = vmatprep.subr.mxu0 0.0
  %359 = vmatpush1.msra.mxu0 %v17
  %360 = vmatprep.subr.mxu0 0.0
  %361 = vmatpush1.msra.mxu0 %v16
  %362 = vmatprep.subr.mxu0 0.0
  %363 = vmatpush2.msra.mxu0 0.0
  %364 = vmatprep.subr.mxu0 0.0
  %365 = vmatpush2.msra.mxu0 0.0
  %366 = vmatprep.subr.mxu0 0.0
  %367 = vmatpush2.msra.mxu0 0.0
  %368 = vmatprep.subr.mxu0 0.0
  %369 = vmatpush2.msra.mxu0 0.0
  %370 = vmatprep.subr.mxu0 0.0
  %371 = vmatpush2.msra.mxu0 0.0
  %372 = vmatprep.subr.mxu0 0.0
  %373 = vmatpush2.msra.mxu0 0.0
  %374 = vmatprep.subr.mxu0 0.0
  %375 = vmatpush2.msra.mxu0 0.0
  %376 = vmatprep.subr.mxu0 0.0
  %377 = vmatpush2.msra.mxu0 0.0
  %378 = vmatprep.subr.mxu0 0.0
  %379 = vmatpush2.msra.mxu0 0.0
  %380 = vmatprep.subr.mxu0 0.0
  %381 = vmatpush2.msra.mxu0 0.0
  %382 = vmatprep.subr.mxu0 0.0
  %383 = vmatpush2.msra.mxu0 0.0
  %384 = vmatprep.subr.mxu0 0.0
  %385 = vmatpush2.msra.mxu0 0.0
  %386 = vmatprep.subr.mxu0 0.0
  %387 = vmatpush2.msra.mxu0 0.0
  %388 = vmatprep.subr.mxu0 0.0
  %389 = vmatpush2.msra.mxu0 0.0
  %390 = vmatprep.subr.mxu0 0.0
  %391 = vmatpush2.msra.mxu0 0.0
  %392 = vmatprep.subr.mxu0 0.0
  %393 = vmatpush2.msra.mxu0 0.0
  %394 = vmatprep.mubr.f32.mxu0 0.0
  %395 = vmatmul.mubr.f32.gmra.mxu0 %v327
  %v396 = vpop.f32.mrf.mxu0
  %v397 = vadd.f32 0.0, %v396
  %v398 = vpop.f32.mrf.mxu0
  %399 = vdwg.mxu0
  %v400 = vadd.f32 %v329, %v397
  %v401 = vtanh.pop %v400
  %s402 = scalar_lea.vmem %s0, 40
  %v403 = vld [vmem:[%s402] sm:$0xff]
  %404 = vmatprep.subr.mxu0 0.0
  %405 = vmatpush1.msra.mxu0 %v31
  %406 = vmatprep.subr.mxu0 0.0
  %407 = vmatpush1.msra.mxu0 %v30
  %408 = vmatprep.subr.mxu0 0.0
  %409 = vmatpush1.msra.mxu0 %v29
  %410 = vmatprep.subr.mxu0 0.0
  %411 = vmatpush1.msra.mxu0 %v28
  %412 = vmatprep.subr.mxu0 0.0
  %413 = vmatpush1.msra.mxu0 %v27
  %414 = vmatprep.subr.mxu0 0.0
  %415 = vmatpush1.msra.mxu0 %v26
  %416 = vmatprep.subr.mxu0 0.0
  %417 = vmatpush1.msra.mxu0 %v25
  %418 = vmatprep.subr.mxu0 0.0
  %419 = vmatpush1.msra.mxu0 %v24
  %420 = vmatprep.subr.mxu0 0.0
  %421 = vmatpush1.msra.mxu0 %v23
  %422 = vmatprep.subr.mxu0 0.0
  %423 = vmatpush1.msra.mxu0 %v22
  %424 = vmatprep.subr.mxu0 0.0
  %425 = vmatpush1.msra.mxu0 %v21
  %426 = vmatprep.subr.mxu0 0.0
  %427 = vmatpush1.msra.mxu0 %v20
  %428 = vmatprep.subr.mxu0 0.0
  %429 = vmatpush1.msra.mxu0 %v19
  %430 = vmatprep.subr.mxu0 0.0
  %431 = vmatpush1.msra.mxu0 %v18
  %432 = vmatprep.subr.mxu0 0.0
  %433 = vmatpush1.msra.mxu0 %v17
  %434 = vmatprep.subr.mxu0 0.0
  %435 = vmatpush1.msra.mxu0 %v16
  %436 = vmatprep.subr.mxu0 0.0
  %437 = vmatpush2.msra.mxu0 0.0
  %438 = vmatprep.subr.mxu0 0.0
  %439 = vmatpush2.msra.mxu0 0.0
  %440 = vmatprep.subr.mxu0 0.0
  %441 = vmatpush2.msra.mxu0 0.0
  %442 = vmatprep.subr.mxu0 0.0
  %443 = vmatpush2.msra.mxu0 0.0
  %444 = vmatprep.subr.mxu0 0.0
  %445 = vmatpush2.msra.mxu0 0.0
  %446 = vmatprep.subr.mxu0 0.0
  %447 = vmatpush2.msra.mxu0 0.0
  %448 = vmatprep.subr.mxu0 0.0
  %449 = vmatpush2.msra.mxu0 0.0
  %450 = vmatprep.subr.mxu0 0.0
  %451 = vmatpush2.msra.mxu0 0.0
  %452 = vmatprep.subr.mxu0 0.0
  %453 = vmatpush2.msra.mxu0 0.0
  %454 = vmatprep.subr.mxu0 0.0
  %455 = vmatpush2.msra.mxu0 0.0
  %456 = vmatprep.subr.mxu0 0.0
  %457 = vmatpush2.msra.mxu0 0.0
  %458 = vmatprep.subr.mxu0 0.0
  %459 = vmatpush2.msra.mxu0 0.0
  %460 = vmatprep.subr.mxu0 0.0
  %461 = vmatpush2.msra.mxu0 0.0
  %462 = vmatprep.subr.mxu0 0.0
  %463 = vmatpush2.msra.mxu0 0.0
  %464 = vmatprep.subr.mxu0 0.0
  %465 = vmatpush2.msra.mxu0 0.0
  %466 = vmatprep.subr.mxu0 0.0
  %467 = vmatpush2.msra.mxu0 0.0
  %468 = vmatprep.mubr.f32.mxu0 0.0
  %469 = vmatmul.mubr.f32.gmra.mxu0 %v401
  %v470 = vpop.f32.mrf.mxu0
  %v471 = vadd.f32 0.0, %v470
  %v472 = vpop.f32.mrf.mxu0
  %473 = vdwg.mxu0
  %v474 = vadd.f32 %v403, %v471
  %v475 = vtanh.pop %v474
  %s476 = scalar_lea.vmem %s0, 48
  %v477 = vld [vmem:[%s476] sm:$0xff]
  %478 = vmatprep.subr.mxu0 0.0
  %479 = vmatpush1.msra.mxu0 %v31
  %480 = vmatprep.subr.mxu0 0.0
  %481 = vmatpush1.msra.mxu0 %v30
  %482 = vmatprep.subr.mxu0 0.0
  %483 = vmatpush1.msra.mxu0 %v29
  %484 = vmatprep.subr.mxu0 0.0
  %485 = vmatpush1.msra.mxu0 %v28
  %486 = vmatprep.subr.mxu0 0.0
  %487 = vmatpush1.msra.mxu0 %v27
  %488 = vmatprep.subr.mxu0 0.0
  %489 = vmatpush1.msra.mxu0 %v26
  %490 = vmatprep.subr.mxu0 0.0
  %491 = vmatpush1.msra.mxu0 %v25
  %492 = vmatprep.subr.mxu0 0.0
  %493 = vmatpush1.msra.mxu0 %v24
  %494 = vmatprep.subr.mxu0 0.0
  %495 = vmatpush1.msra.mxu0 %v23
  %496 = vmatprep.subr.mxu0 0.0
  %497 = vmatpush1.msra.mxu0 %v22
  %498 = vmatprep.subr.mxu0 0.0
  %499 = vmatpush1.msra.mxu0 %v21
  %500 = vmatprep.subr.mxu0 0.0
  %501 = vmatpush1.msra.mxu0 %v20
  %502 = vmatprep.subr.mxu0 0.0
  %503 = vmatpush1.msra.mxu0 %v19
  %504 = vmatprep.subr.mxu0 0.0
  %505 = vmatpush1.msra.mxu0 %v18
  %506 = vmatprep.subr.mxu0 0.0
  %507 = vmatpush1.msra.mxu0 %v17
  %508 = vmatprep.subr.mxu0 0.0
  %509 = vmatpush1.msra.mxu0 %v16
  %510 = vmatprep.subr.mxu0 0.0
  %511 = vmatpush2.msra.mxu0 0.0
  %512 = vmatprep.subr.mxu0 0.0
  %513 = vmatpush2.msra.mxu0 0.0
  %514 = vmatprep.subr.mxu0 0.0
  %515 = vmatpush2.msra.mxu0 0.0
  %516 = vmatprep.subr.mxu0 0.0
  %517 = vmatpush2.msra.mxu0 0.0
  %518 = vmatprep.subr.mxu0 0.0
  %519 = vmatpush2.msra.mxu0 0.0
  %520 = vmatprep.subr.mxu0 0.0
  %521 = vmatpush2.msra.mxu0 0.0
  %522 = vmatprep.subr.mxu0 0.0
  %523 = vmatpush2.msra.mxu0 0.0
  %524 = vmatprep.subr.mxu0 0.0
  %525 = vmatpush2.msra.mxu0 0.0
  %526 = vmatprep.subr.mxu0 0.0
  %527 = vmatpush2.msra.mxu0 0.0
  %528 = vmatprep.subr.mxu0 0.0
  %529 = vmatpush2.msra.mxu0 0.0
  %530 = vmatprep.subr.mxu0 0.0
  %531 = vmatpush2.msra.mxu0 0.0
  %532 = vmatprep.subr.mxu0 0.0
  %533 = vmatpush2.msra.mxu0 0.0
  %534 = vmatprep.subr.mxu0 0.0
  %535 = vmatpush2.msra.mxu0 0.0
  %536 = vmatprep.subr.mxu0 0.0
  %537 = vmatpush2.msra.mxu0 0.0
  %538 = vmatprep.subr.mxu0 0.0
  %539 = vmatpush2.msra.mxu0 0.0
  %540 = vmatprep.subr.mxu0 0.0
  %541 = vmatpush2.msra.mxu0 0.0
  %542 = vmatprep.mubr.f32.mxu0 0.0
  %543 = vmatmul.mubr.f32.gmra.mxu0 %v475
  %v544 = vpop.f32.mrf.mxu0
  %v545 = vadd.f32 0.0, %v544
  %v546 = vpop.f32.mrf.mxu0
  %547 = vdwg.mxu0
  %v548 = vadd.f32 %v477, %v545
  %v549 = vtanh.pop %v548
  %s550 = scalar_lea.vmem %s0, 56
  %v551 = vld [vmem:[%s550] sm:$0xff]
  %552 = vmatprep.subr.mxu0 0.0
  %553 = vmatpush1.msra.mxu0 %v31
  %554 = vmatprep.subr.mxu0 0.0
  %555 = vmatpush1.msra.mxu0 %v30
  %556 = vmatprep.subr.mxu0 0.0
  %557 = vmatpush1.msra.mxu0 %v29
  %558 = vmatprep.subr.mxu0 0.0
  %559 = vmatpush1.msra.mxu0 %v28
  %560 = vmatprep.subr.mxu0 0.0
  %561 = vmatpush1.msra.mxu0 %v27
  %562 = vmatprep.subr.mxu0 0.0
  %563 = vmatpush1.msra.mxu0 %v26
  %564 = vmatprep.subr.mxu0 0.0
  %565 = vmatpush1.msra.mxu0 %v25
  %566 = vmatprep.subr.mxu0 0.0
  %567 = vmatpush1.msra.mxu0 %v24
  %568 = vmatprep.subr.mxu0 0.0
  %569 = vmatpush1.msra.mxu0 %v23
  %570 = vmatprep.subr.mxu0 0.0
  %571 = vmatpush1.msra.mxu0 %v22
  %572 = vmatprep.subr.mxu0 0.0
  %573 = vmatpush1.msra.mxu0 %v21
  %574 = vmatprep.subr.mxu0 0.0
  %575 = vmatpush1.msra.mxu0 %v20
  %576 = vmatprep.subr.mxu0 0.0
  %577 = vmatpush1.msra.mxu0 %v19
  %578 = vmatprep.subr.mxu0 0.0
  %579 = vmatpush1.msra.mxu0 %v18
  %580 = vmatprep.subr.mxu0 0.0
  %581 = vmatpush1.msra.mxu0 %v17
  %582 = vmatprep.subr.mxu0 0.0
  %583 = vmatpush1.msra.mxu0 %v16
  %584 = vmatprep.subr.mxu0 0.0
  %585 = vmatpush2.msra.mxu0 0.0
  %586 = vmatprep.subr.mxu0 0.0
  %587 = vmatpush2.msra.mxu0 0.0
  %588 = vmatprep.subr.mxu0 0.0
  %589 = vmatpush2.msra.mxu0 0.0
  %590 = vmatprep.subr.mxu0 0.0
  %591 = vmatpush2.msra.mxu0 0.0
  %592 = vmatprep.subr.mxu0 0.0
  %593 = vmatpush2.msra.mxu0 0.0
  %594 = vmatprep.subr.mxu0 0.0
  %595 = vmatpush2.msra.mxu0 0.0
  %596 = vmatprep.subr.mxu0 0.0
  %597 = vmatpush2.msra.mxu0 0.0
  %598 = vmatprep.subr.mxu0 0.0
  %599 = vmatpush2.msra.mxu0 0.0
  %600 = vmatprep.subr.mxu0 0.0
  %601 = vmatpush2.msra.mxu0 0.0
  %602 = vmatprep.subr.mxu0 0.0
  %603 = vmatpush2.msra.mxu0 0.0
  %604 = vmatprep.subr.mxu0 0.0
  %605 = vmatpush2.msra.mxu0 0.0
  %606 = vmatprep.subr.mxu0 0.0
  %607 = vmatpush2.msra.mxu0 0.0
  %608 = vmatprep.subr.mxu0 0.0
  %609 = vmatpush2.msra.mxu0 0.0
  %610 = vmatprep.subr.mxu0 0.0
  %611 = vmatpush2.msra.mxu0 0.0
  %612 = vmatprep.subr.mxu0 0.0
  %613 = vmatpush2.msra.mxu0 0.0
  %614 = vmatprep.subr.mxu0 0.0
  %615 = vmatpush2.msra.mxu0 0.0
  %616 = vmatprep.mubr.f32.mxu0 0.0
  %617 = vmatmul.mubr.f32.gmra.mxu0 %v549
  %v618 = vpop.f32.mrf.mxu0
  %v619 = vadd.f32 0.0, %v618
  %v620 = vpop.f32.mrf.mxu0
  %621 = vdwg.mxu0
  %v622 = vadd.f32 %v551, %v619
  %v623 = vtanh.pop %v622
  %624 = vst [vmem:[%s2] sm:$0xff] %v623
  // Predicated region
  $region14: #{rnn_forward.1} parent=0 // pred_check
    _
  $region15: #{rnn_forward.1} parent=0 // pred_check_branch
    %626 = sbr.rel (0) target = $region17
  $region16: #{rnn_forward.1} parent=0 // pred_region
    _
  $region17: #{rnn_forward.1} parent=0 // pred_fallthru
    _
  // Predicated region
  $region18: #{rnn_forward.1} parent=0 // pred_check
    _
  $region19: #{rnn_forward.1} parent=0 // pred_check_branch
    %628 = sbr.rel (0) target = $region21
  $region20: #{rnn_forward.1} parent=0 // pred_region
    _
  $region21: #{rnn_forward.1} parent=0 // pred_fallthru
    _

</llo_original>
